<compile_context>
chip_gen: v6e
topology: v6e:2x2x1
jax: 0.10.0
libtpu: 0.0.40
codegen_flags: <defaults>
</compile_context>

<pallas_src>
import numpy as np
import jax
import jax.numpy as jnp
from jax import lax
from jax.experimental import pallas as pl
from jax.experimental.pallas import tpu as pltpu

LN_EPS = 0.1                                   # nn.LayerNorm(hidden_dim, eps=0.1)
GAMMA = 0.005
MIX_W = (3.0 / 20.0, 3.0 / 4.0, 1.0 / 10.0)
LOGW = tuple(float(np.log(w)) for w in MIX_W)
LOG2PI = float(np.log(2.0 * np.pi))
N_TAIL = 22                                    # per-encoder params after fc1 (see init)


# ---------------- small helpers ------------------------------------------------------------------

def _vmem_limit_bytes():
    """Generation-aware scoped-VMEM limit: ~96 MiB on v5e/v6e (128 MiB), ~48 MiB on v7x (64 MiB)."""
    cap = 128 * 1024 * 1024
    try:
        info = pltpu.get_tpu_info()
        cap = int(getattr(info, "vmem_capacity_bytes", cap))
    except Exception:
        pass
    return min((cap * 3) // 4, 100 * 1024 * 1024)


def _spec(shape, index_map, buffers=None):
    """BlockSpec, optionally single/multi-buffered; falls back if pipeline_mode unsupported."""
    if buffers is not None and hasattr(pl, "Buffered"):
        try:
            return pl.BlockSpec(shape, index_map, pipeline_mode=pl.Buffered(buffers))
        except TypeError:
            pass
    return pl.BlockSpec(shape, index_map)


def _pick_tile(n, align, cap, prefer_min_tiles=1):
    """Largest divisor of n that is a multiple of `align`, <= cap; prefer >= prefer_min_tiles tiles."""
    if n <= align:
        return n
    best, best_pref = None, None
    t = align
    top = min(n, cap)
    while t <= top:
        if n % t == 0:
            best = t
            if n // t >= prefer_min_tiles:
                best_pref = t
        t += align
    if best_pref is not None:
        return best_pref
    if best is not None:
        return best
    return n


# ---------------- shared elementwise math (used in-kernel and by the reference) -------------------

def _swish(x):
    return x * (1.0 / (1.0 + jnp.exp(-x)))


def _layernorm(x, g, b):
    m = jnp.mean(x, axis=-1, keepdims=True)
    v = jnp.mean((x - m) ** 2, axis=-1, keepdims=True)
    return (x - m) * lax.rsqrt(v + LN_EPS) * g + b


def _log_norm_pdf(x, mu, logvar):
    # (x-mu)^2 * exp(-logvar) instead of /exp(logvar): one EUP exp, no divide.
    return -0.5 * (logvar + LOG2PI + (x - mu) ** 2 * jnp.exp(-logvar))


def _encoder_tail(pre1, p):
    """Encoder layers after fc1.  `pre1` = (x/||x||) @ fc1w + fc1b.

    `p` holds 22 refs (in-kernel) or arrays (reference); `[...]` works for both.
    Residual sums use a running accumulator instead of re-summing h1..h_{k-1}.
    """
    (ln1g, ln1b,
     fc2w, fc2b, ln2g, ln2b,
     fc3w, fc3b, ln3g, ln3b,
     fc4w, fc4b, ln4g, ln4b,
     fc5w, fc5b, ln5g, ln5b,
     muw, mub, lvw, lvb) = p

    def lin(h, w, b):
        return jnp.dot(h, w[...], preferred_element_type=jnp.float32) + b[...]

    h1 = _layernorm(_swish(pre1), ln1g[...], ln1b[...])
    acc = h1
    h2 = _layernorm(_swish(lin(h1, fc2w, fc2b) + acc), ln2g[...], ln2b[...])
    acc = acc + h2
    h3 = _layernorm(_swish(lin(h2, fc3w, fc3b) + acc), ln3g[...], ln3b[...])
    acc = acc + h3
    h4 = _layernorm(_swish(lin(h3, fc4w, fc4b) + acc), ln4g[...], ln4b[...])
    acc = acc + h4
    h5 = _layernorm(_swish(lin(h4, fc5w, fc5b) + acc), ln5g[...], ln5b[...])
    mu = lin(h5, muw, mub)
    logvar = lin(h5, lvw, lvb)
    return mu, logvar


# ---------------- kernel 1: streaming fused fc1 + sum(x^2) + sum(x) -------------------------------

def fc1_kernel(x_ref, fc1w_ref, fc1b_ref, pre1_ref, sumx_ref, sumsq_sc):
    i = pl.program_id(1)

    @pl.when(i == 0)
    def _():
        pre1_ref[...] = jnp.zeros_like(pre1_ref)
        sumx_ref[...] = jnp.zeros_like(sumx_ref)
        sumsq_sc[...] = jnp.zeros_like(sumsq_sc)

    xb = x_ref[...]                                               # (TB, TI), bf16 or f32
    pre1_ref[...] += jnp.dot(xb, fc1w_ref[...],                   # fused fc1 (both encoders)
                             preferred_element_type=jnp.float32)  # (TB, 2H) f32 accumulation
    xf = xb.astype(jnp.float32)
    sumsq_sc[...] += jnp.sum(xf * xf, axis=-1, keepdims=True)
    sumx_ref[...] += jnp.sum(xf, axis=-1, keepdims=True)

    @pl.when(i == pl.num_programs(1) - 1)
    def _():
        # (x/||x||) @ W == (x @ W) * rsqrt(sum(x^2));  no eps, as in the original module.
        pre1_ref[...] = pre1_ref[...] * lax.rsqrt(sumsq_sc[...]) + fc1b_ref[...]


# ---------------- kernel 2: encoder tails + composite prior + per-row KLD -------------------------

def tail_kernel(*refs):
    n_in = 3 + 2 * N_TAIL + 3
    pre_new_ref, pre_old_ref, sumx_ref = refs[0:3]
    enc_tail = refs[3:3 + N_TAIL]
    old_tail = refs[3 + N_TAIL:3 + 2 * N_TAIL]
    mu_pr_ref, lv_pr_ref, lv_un_ref = refs[3 + 2 * N_TAIL:n_in]
    z_ref, kld_ref = refs[n_in], refs[n_in + 1]

    mu, logvar = _encoder_tail(pre_new_ref[...], enc_tail)
    post_mu, post_lv = _encoder_tail(pre_old_ref[...], old_tail)
    z = mu                                                        # eval-mode reparameterize

    mu_pr = mu_pr_ref[...]
    g0 = _log_norm_pdf(z, mu_pr, lv_pr_ref[...]) + LOGW[0]
    g1 = _log_norm_pdf(z, post_mu, post_lv) + LOGW[1]
    g2 = _log_norm_pdf(z, mu_pr, lv_un_ref[...]) + LOGW[2]
    m = jnp.maximum(jnp.maximum(g0, g1), g2)
    prior_log = m + jnp.log(jnp.exp(g0 - m) + jnp.exp(g1 - m) + jnp.exp(g2 - m))

    kl_w = GAMMA * sumx_ref[...]                                  # (TB, 1)
    kld_ref[...] = jnp.sum(_log_norm_pdf(z, mu, logvar) - prior_log,
                           axis=-1, keepdims=True) * kl_w
    z_ref[...] = z


# ---------------- kernel 3: decoder + online log-softmax + per-row MLL ----------------------------

def decoder_kernel(z_ref, x_ref, sumx_ref, dec_w_ref, dec_b_ref,
                   xpred_ref, mll_ref, m_sc, l_sc):
    i = pl.program_id(1)

    @pl.when(i == 0)
    def _():
        m_sc[...] = jnp.full_like(m_sc, -jnp.inf)
        l_sc[...] = jnp.zeros_like(l_sc)
        mll_ref[...] = jnp.zeros_like(mll_ref)                    # running sum(x_pred * x)

    xp = jnp.dot(z_ref[...], dec_w_ref[...].astype(jnp.float32),
                 preferred_element_type=jnp.float32) + dec_b_ref[...]   # (TB, TI)
    xpred_ref[...] = xp
    xb = x_ref[...].astype(jnp.float32)

    # online logsumexp across item tiles
    m_new = jnp.maximum(m_sc[...], jnp.max(xp, axis=-1, keepdims=True))
    l_sc[...] = (l_sc[...] * jnp.exp(m_sc[...] - m_new)
                 + jnp.sum(jnp.exp(xp - m_new), axis=-1, keepdims=True))
    m_sc[...] = m_new
    mll_ref[...] += jnp.sum(xp * xb, axis=-1, keepdims=True)

    @pl.when(i == pl.num_programs(1) - 1)
    def _():
        lse = m_sc[...] + jnp.log(l_sc[...])
        # sum(log_softmax(x_pred) * x) = sum(x_pred * x) - lse * sum(x)
        mll_ref[...] = mll_ref[...] - lse * sumx_ref[...]


# ---------------- wrapper --------------------------------------------------------------------------

def recvae_forward(x, params, *, tb=None, ti=None, x_bf16=True):
    """Eval-mode RecVAE forward with calculate_loss=True.  Returns (x_pred, mll, kld, nelbo)."""
    B, I = x.shape
    H2 = params["fc1b"].shape[-1]
    H = H2 // 2
    L = params["mu_prior"].shape[-1]

    vmem_limit = _vmem_limit_bytes()

    # binary / small-integer ratings are exact in bf16; halves the x HBM stream
    x_in = x.astype(jnp.bfloat16) if x_bf16 else x
    x_align = 16 if x_in.dtype == jnp.bfloat16 else 8

    if tb is None:
        # as large as reasonable, but keep >= 2 batch tiles so v7x megacore stays busy
        tb = _pick_tile(B, x_align, 512, prefer_min_tiles=2)
    if ti is None:
        w_bytes = params["fc1w"].dtype.itemsize
        cap_ti = max(128, ((vmem_limit // 6) // max(1, H2 * w_bytes)) // 128 * 128)
        ti = _pick_tile(I, 256 if I % 256 == 0 else 128, min(cap_ti, 4096))
    assert B % tb == 0 and (tb % x_align == 0 or tb == B), "bad batch tile"
    assert I % ti == 0 and (ti % 128 == 0 or ti == I), "bad item tile"
    nb, ni = B // tb, I // ti

    comp2d = pltpu.CompilerParams(dimension_semantics=("parallel", "arbitrary"),
                                  vmem_limit_bytes=vmem_limit)
    comp1d = pltpu.CompilerParams(dimension_semantics=("parallel",),
                                  vmem_limit_bytes=vmem_limit)

    def const2(arr):   # constant-index input on the 2-D grid -> single-buffered
        return _spec(arr.shape, lambda b, i: (0, 0), buffers=1)

    def const1(arr):   # constant-index input on the 1-D grid -> single-buffered
        return _spec(arr.shape, lambda b: (0, 0), buffers=1)

    # ---- kernel 1: streaming fused fc1 ----
    # TODO(synk): bump streaming specs (x, fc1w) to pl.Buffered(3) if a profile shows
    #             exposed DMA at item-tile boundaries after the VMEM freed here.
    pre1, sumx = pl.pallas_call(
        fc1_kernel,
        out_shape=(jax.ShapeDtypeStruct((B, H2), jnp.float32),     # pre1 = normalized fc1 + bias
                   jax.ShapeDtypeStruct((B, 1), jnp.float32)),     # sum(x) per row
        grid_spec=pltpu.PrefetchScalarGridSpec(
            num_scalar_prefetch=0,
            grid=(nb, ni),
            in_specs=[_spec((tb, ti), lambda b, i: (b, i)),        # x
                      _spec((ti, H2), lambda b, i: (i, 0)),        # fused fc1 weight (bf16)
                      const2(params["fc1b"])],
            out_specs=(_spec((tb, H2), lambda b, i: (b, 0)),
                       _spec((tb, 1), lambda b, i: (b, 0))),
            scratch_shapes=[pltpu.VMEM((tb, 1), jnp.float32)]),    # sum(x^2)
        compiler_params=comp2d,
    )(x_in, params["fc1w"], params["fc1b"])

    pre_new = pre1[:, :H]
    pre_old = pre1[:, H:]

    # ---- kernel 2: encoder tails + prior + KLD (batch-only grid) ----
    tail_args = (list(params["enc_tail"]) + list(params["enc_old_tail"])
                 + [params["mu_prior"], params["logvar_prior"], params["logvar_unif"]])
    z, kld_per = pl.pallas_call(
        tail_kernel,
        out_shape=(jax.ShapeDtypeStruct((B, L), jnp.float32),      # z
                   jax.ShapeDtypeStruct((B, 1), jnp.float32)),     # kld per row
        grid_spec=pltpu.PrefetchScalarGridSpec(
            num_scalar_prefetch=0,
            grid=(nb,),
            in_specs=([_spec((tb, H), lambda b: (b, 0)),           # pre1 (new encoder half)
                       _spec((tb, H), lambda b: (b, 0)),           # pre1 (old encoder half)
                       _spec((tb, 1), lambda b: (b, 0))]           # sum(x)
                      + [const1(a) for a in tail_args]),
            out_specs=(_spec((tb, L), lambda b: (b, 0)),
                       _spec((tb, 1), lambda b: (b, 0)))),
        compiler_params=comp1d,
    )(pre_new, pre_old, sumx, *tail_args)

    # ---- kernel 3: decoder + MLL ----
    x_pred, mll_per = pl.pallas_call(
        decoder_kernel,
        out_shape=(jax.ShapeDtypeStruct((B, I), jnp.float32),      # x_pred
                   jax.ShapeDtypeStruct((B, 1), jnp.float32)),     # mll per row
        grid_spec=pltpu.PrefetchScalarGridSpec(
            num_scalar_prefetch=0,
            grid=(nb, ni),
            in_specs=[_spec((tb, L), lambda b, i: (b, 0)),         # z
                      _spec((tb, ti), lambda b, i: (b, i)),        # x
                      _spec((tb, 1), lambda b, i: (b, 0)),         # sum(x) from kernel 1
                      _spec((L, ti), lambda b, i: (0, i)),         # dec_w (bf16)
                      _spec((1, ti), lambda b, i: (0, i))],        # dec_b
            out_specs=(_spec((tb, ti), lambda b, i: (b, i)),
                       _spec((tb, 1), lambda b, i: (b, 0))),
            scratch_shapes=[pltpu.VMEM((tb, 1), jnp.float32),      # running max
                            pltpu.VMEM((tb, 1), jnp.float32)]),    # running exp-sum
        compiler_params=comp2d,
    )(z, x_in, sumx, params["dec_w"], params["dec_b"])

    # tiny batch-mean reductions in plain JAX so the batch grid axis stays "parallel"
    mll = jnp.mean(mll_per)
    kld = jnp.mean(kld_per)
    nelbo = -(mll - kld)
    return x_pred, mll, kld, nelbo


# ---------------- deterministic parameter construction (kernel layout) ----------------------------

def init_encoder_tail(key, hidden_dim, latent_dim):
    keys = jax.random.split(key, 6)
    tail = [jnp.ones((1, hidden_dim), jnp.float32), jnp.zeros((1, hidden_dim), jnp.float32)]  # ln1
    for i in range(4):                                   # fc2..fc5 + ln2..ln5
        k = keys[i]
        w = jax.random.normal(jax.random.fold_in(k, 0), (hidden_dim, hidden_dim), jnp.float32) * 0.05
        b = jax.random.normal(jax.random.fold_in(k, 1), (1, hidden_dim), jnp.float32) * 0.05
        tail += [w, b, jnp.ones((1, hidden_dim), jnp.float32), jnp.zeros((1, hidden_dim), jnp.float32)]
    kmu, klv = keys[4], keys[5]
    muw = jax.random.normal(jax.random.fold_in(kmu, 0), (hidden_dim, latent_dim), jnp.float32) * 0.05
    mub = jax.random.normal(jax.random.fold_in(kmu, 1), (1, latent_dim), jnp.float32) * 0.05
    lvw = jax.random.normal(jax.random.fold_in(klv, 0), (hidden_dim, latent_dim), jnp.float32) * 0.05
    lvb = jax.random.normal(jax.random.fold_in(klv, 1), (1, latent_dim), jnp.float32) * 0.05
    tail += [muw, mub, lvw, lvb]
    assert len(tail) == N_TAIL
    return tail


def init_recvae_params(key, input_dim, hidden_dim, latent_dim):
    k_enc, k_old, k_dec, k_f1a, k_f1b = jax.random.split(key, 5)

    def fc1(k):
        w = jax.random.normal(jax.random.fold_in(k, 0), (input_dim, hidden_dim), jnp.float32) * 0.05
        b = jax.random.normal(jax.random.fold_in(k, 1), (1, hidden_dim), jnp.float32) * 0.05
        return w, b

    w_new, b_new = fc1(k_f1a)
    w_old, b_old = fc1(k_f1b)
    return {
        # big streamed weights stored bf16 (halves HBM traffic; f32 MXU accumulation in-kernel)
        "fc1w": jnp.concatenate([w_new, w_old], axis=1).astype(jnp.bfloat16),   # (I, 2H)
        "fc1b": jnp.concatenate([b_new, b_old], axis=1),                        # (1, 2H) f32
        "enc_tail": init_encoder_tail(k_enc, hidden_dim, latent_dim),
        "enc_old_tail": init_encoder_tail(k_old, hidden_dim, latent_dim),
        "dec_w": (jax.random.normal(jax.random.fold_in(k_dec, 0),
                                    (latent_dim, input_dim), jnp.float32) * 0.05
                  ).astype(jnp.bfloat16),                                       # (L, I) bf16
        "dec_b": jax.random.normal(jax.random.fold_in(k_dec, 1),
                                   (1, input_dim), jnp.float32) * 0.05,
        "mu_prior": jnp.zeros((1, latent_dim), jnp.float32),
        "logvar_prior": jnp.zeros((1, latent_dim), jnp.float32),
        "logvar_unif": jnp.full((1, latent_dim), 10.0, jnp.float32),
    }


# ---------------- pure-JAX reference (straightforward math, same stored weights) ------------------

def recvae_reference(x, params):
    H2 = params["fc1b"].shape[-1]
    H = H2 // 2
    fc1w = params["fc1w"].astype(jnp.float32)
    dec_w = params["dec_w"].astype(jnp.float32)

    norm = jnp.sqrt(jnp.sum(x * x, axis=-1, keepdims=True))
    xn = x / norm
    pre1 = xn @ fc1w + params["fc1b"]
    mu, logvar = _encoder_tail(pre1[:, :H], params["enc_tail"])
    post_mu, post_lv = _encoder_tail(pre1[:, H:], params["enc_old_tail"])
    z = mu
    x_pred = z @ dec_w + params["dec_b"]
    mll = jnp.mean(jnp.sum(jax.nn.log_softmax(x_pred, axis=-1) * x, axis=-1))
    gs = jnp.stack(
        [_log_norm_pdf(z, params["mu_prior"], params["logvar_prior"]) + LOGW[0],
         _log_norm_pdf(z, post_mu, post_lv) + LOGW[1],
         _log_norm_pdf(z, params["mu_prior"], params["logvar_unif"]) + LOGW[2]],
        axis=-1)
    prior_log = jax.nn.logsumexp(gs, axis=-1)
    kl_weight = GAMMA * jnp.sum(x, axis=-1)
    kld = jnp.mean(jnp.sum(_log_norm_pdf(z, mu, logvar) - prior_log, axis=-1) * kl_weight)
    return x_pred, mll, kld, -(mll - kld)


if __name__ == "__main__":
    # small shapes: batch=32, items=1024, hidden=64, latent=32
    B, I, H, L = 32, 1024, 64, 32
    key = jax.random.PRNGKey(0)
    k_x, k_p = jax.random.split(key)

    # binary user rating matrix (p=0.3, so no all-zero rows at these sizes; exact in bf16)
    user_ratings = jax.random.bernoulli(k_x, p=0.3, shape=(B, I)).astype(jnp.float32)
    params = init_recvae_params(k_p, I, H, L)

    # grid: (2 batch tiles) x (4 item tiles); bf16 x -> batch tile multiple of 16
    x_pred, mll, kld, nelbo = recvae_forward(user_ratings, params, tb=16, ti=256)
    jax.block_until_ready((x_pred, mll, kld, nelbo))

    # numerical check vs pure-JAX reference (same stored weights)
    xr, mr, kr, nr = recvae_reference(user_ratings, params)
    np.testing.assert_allclose(np.asarray(x_pred), np.asarray(xr), rtol=5e-3, atol=5e-3)
    np.testing.assert_allclose(float(mll), float(mr), rtol=5e-3, atol=5e-3)
    np.testing.assert_allclose(float(kld), float(kr), rtol=5e-3, atol=5e-3)
    np.testing.assert_allclose(float(nelbo), float(nr), rtol=5e-3, atol=5e-3)

    print("KERNEL_OK")
</pallas_src>

<mosaic_0001>
module attributes {stable_mosaic.version = 11 : i64} {
  func.func @fc1_kernel(%arg0: i32, %arg1: i32, %arg2: memref<16x256xbf16, #tpu.memory_space<vmem>>, %arg3: memref<256x128xbf16, #tpu.memory_space<vmem>>, %arg4: memref<1x128xf32, #tpu.memory_space<vmem>>, %arg5: memref<16x128xf32, #tpu.memory_space<vmem>>, %arg6: memref<16x1xf32, #tpu.memory_space<vmem>>, %arg7: memref<16x1xf32, #tpu.memory_space<vmem>>) attributes {dimension_semantics = [#tpu.dimension_semantics<parallel>, #tpu.dimension_semantics<arbitrary>], iteration_bounds = array<i64: 2, 4>, scalar_prefetch = 0 : i64, scratch_operands = 1 : i64, tpu.core_type = #tpu.core_type<tc>, window_params = [{transform_indices = @transform_0, window_bounds = array<i64: 16, 256>}, {transform_indices = @transform_1, window_bounds = array<i64: 256, 128>}, {pipeline_mode = #tpu.pipeline_mode<synchronous>, transform_indices = @transform_2, window_bounds = array<i64: 1, 128>}, {transform_indices = @transform_3, window_bounds = array<i64: 16, 128>}, {transform_indices = @transform_4, window_bounds = array<i64: 16, 1>}]} {
    %c0_i32 = arith.constant 0 : i32
    %0 = arith.cmpi eq, %arg1, %c0_i32 : i32
    %1 = arith.extui %0 : i1 to i32
    %c0_i32_0 = arith.constant 0 : i32
    %2 = arith.cmpi ne, %1, %c0_i32_0 : i32
    scf.if %2 {
      %cst_19 = arith.constant 0.000000e+00 : f32
      %24 = vector.broadcast %cst_19 : f32 to vector<16x128xf32>
      %c0_20 = arith.constant 0 : index
      %c0_21 = arith.constant 0 : index
      %25 = vector.load %arg5[%c0_20, %c0_21] : memref<16x128xf32, #tpu.memory_space<vmem>>, vector<16x128xf32>
      tpu.vector_store %arg5[%c0_20, %c0_21], %24 {strides = array<i32>} : memref<16x128xf32, #tpu.memory_space<vmem>>, vector<16x128xf32>,
      %cst_22 = arith.constant 0.000000e+00 : f32
      %26 = vector.broadcast %cst_22 : f32 to vector<16x1xf32>
      %c0_23 = arith.constant 0 : index
      %c0_24 = arith.constant 0 : index
      %27 = vector.load %arg6[%c0_23, %c0_24] : memref<16x1xf32, #tpu.memory_space<vmem>>, vector<16x1xf32>
      tpu.vector_store %arg6[%c0_23, %c0_24], %26 {strides = array<i32>} : memref<16x1xf32, #tpu.memory_space<vmem>>, vector<16x1xf32>,
      %cst_25 = arith.constant 0.000000e+00 : f32
      %28 = vector.broadcast %cst_25 : f32 to vector<16x1xf32>
      %c0_26 = arith.constant 0 : index
      %c0_27 = arith.constant 0 : index
      %29 = vector.load %arg7[%c0_26, %c0_27] : memref<16x1xf32, #tpu.memory_space<vmem>>, vector<16x1xf32>
      tpu.vector_store %arg7[%c0_26, %c0_27], %28 {strides = array<i32>} : memref<16x1xf32, #tpu.memory_space<vmem>>, vector<16x1xf32>,
    } else {
    }
    %c0 = arith.constant 0 : index
    %c0_1 = arith.constant 0 : index
    %3 = vector.load %arg2[%c0, %c0_1] : memref<16x256xbf16, #tpu.memory_space<vmem>>, vector<16x256xbf16>
    %c0_2 = arith.constant 0 : index
    %c0_3 = arith.constant 0 : index
    %4 = vector.load %arg5[%c0_2, %c0_3] : memref<16x128xf32, #tpu.memory_space<vmem>>, vector<16x128xf32>
    %c0_4 = arith.constant 0 : index
    %c0_5 = arith.constant 0 : index
    %5 = vector.load %arg3[%c0_4, %c0_5] : memref<256x128xbf16, #tpu.memory_space<vmem>>, vector<256x128xbf16>
    %cst = arith.constant dense<0.000000e+00> : vector<16x128xf32>
    %6 = tpu.matmul %3, %5, %cst {dimension_numbers = #tpu.dot_dimension_numbers<[1], [0], [0], [1], [0, 0, 1, 1], [], []>} : vector<16x256xbf16>, vector<256x128xbf16>, vector<16x128xf32> -> vector<16x128xf32>
    %7 = arith.addf %4, %6 : vector<16x128xf32>
    %c0_6 = arith.constant 0 : index
    %c0_7 = arith.constant 0 : index
    %8 = vector.load %arg5[%c0_6, %c0_7] : memref<16x128xf32, #tpu.memory_space<vmem>>, vector<16x128xf32>
    tpu.vector_store %arg5[%c0_6, %c0_7], %7 {strides = array<i32>} : memref<16x128xf32, #tpu.memory_space<vmem>>, vector<16x128xf32>,
    %9 = arith.extf %3 : vector<16x256xbf16> to vector<16x256xf32>
    %c0_8 = arith.constant 0 : index
    %c0_9 = arith.constant 0 : index
    %10 = vector.load %arg7[%c0_8, %c0_9] : memref<16x1xf32, #tpu.memory_space<vmem>>, vector<16x1xf32>
    %11 = arith.mulf %9, %9 : vector<16x256xf32>
    %cst_10 = arith.constant dense<0.000000e+00> : vector<16xf32>
    %12 = vector.multi_reduction <add>, %11, %cst_10 [1] : vector<16x256xf32> to vector<16xf32>
    %13 = vector.shape_cast %12 : vector<16xf32> to vector<16x1xf32>
    %14 = arith.addf %10, %13 : vector<16x1xf32>
    %c0_11 = arith.constant 0 : index
    %c0_12 = arith.constant 0 : index
    %15 = vector.load %arg7[%c0_11, %c0_12] : memref<16x1xf32, #tpu.memory_space<vmem>>, vector<16x1xf32>
    tpu.vector_store %arg7[%c0_11, %c0_12], %14 {strides = array<i32>} : memref<16x1xf32, #tpu.memory_space<vmem>>, vector<16x1xf32>,
    %c0_13 = arith.constant 0 : index
    %c0_14 = arith.constant 0 : index
    %16 = vector.load %arg6[%c0_13, %c0_14] : memref<16x1xf32, #tpu.memory_space<vmem>>, vector<16x1xf32>
    %cst_15 = arith.constant dense<0.000000e+00> : vector<16xf32>
    %17 = vector.multi_reduction <add>, %9, %cst_15 [1] : vector<16x256xf32> to vector<16xf32>
    %18 = vector.shape_cast %17 : vector<16xf32> to vector<16x1xf32>
    %19 = arith.addf %16, %18 : vector<16x1xf32>
    %c0_16 = arith.constant 0 : index
    %c0_17 = arith.constant 0 : index
    %20 = vector.load %arg6[%c0_16, %c0_17] : memref<16x1xf32, #tpu.memory_space<vmem>>, vector<16x1xf32>
    tpu.vector_store %arg6[%c0_16, %c0_17], %19 {strides = array<i32>} : memref<16x1xf32, #tpu.memory_space<vmem>>, vector<16x1xf32>,
    %c3_i32 = arith.constant 3 : i32
    %21 = arith.cmpi eq, %arg1, %c3_i32 : i32
    %22 = arith.extui %21 : i1 to i32
    %c0_i32_18 = arith.constant 0 : i32
    %23 = arith.cmpi ne, %22, %c0_i32_18 : i32
    scf.if %23 {
      %c0_19 = arith.constant 0 : index
      %c0_20 = arith.constant 0 : index
      %24 = vector.load %arg5[%c0_19, %c0_20] : memref<16x128xf32, #tpu.memory_space<vmem>>, vector<16x128xf32>
      %c0_21 = arith.constant 0 : index
      %c0_22 = arith.constant 0 : index
      %25 = vector.load %arg7[%c0_21, %c0_22] : memref<16x1xf32, #tpu.memory_space<vmem>>, vector<16x1xf32>
      %26 = math.rsqrt %25 : vector<16x1xf32>
      %27 = vector.broadcast %26 : vector<16x1xf32> to vector<16x128xf32>
      %28 = arith.mulf %24, %27 : vector<16x128xf32>
      %c0_23 = arith.constant 0 : index
      %c0_24 = arith.constant 0 : index
      %29 = vector.load %arg4[%c0_23, %c0_24] : memref<1x128xf32, #tpu.memory_space<vmem>>, vector<1x128xf32>
      %30 = vector.broadcast %29 : vector<1x128xf32> to vector<16x128xf32>
      %31 = arith.addf %28, %30 : vector<16x128xf32>
      %c0_25 = arith.constant 0 : index
      %c0_26 = arith.constant 0 : index
      %32 = vector.load %arg5[%c0_25, %c0_26] : memref<16x128xf32, #tpu.memory_space<vmem>>, vector<16x128xf32>
      tpu.vector_store %arg5[%c0_25, %c0_26], %31 {strides = array<i32>} : memref<16x128xf32, #tpu.memory_space<vmem>>, vector<16x128xf32>,
    } else {
    }
    return
  }
  func.func @transform_0(%arg0: i32, %arg1: i32) -> (i32, i32) {
    %c0_i32 = arith.constant 0 : i32
    return %arg0, %arg1 : i32, i32
  }
  func.func @transform_1(%arg0: i32, %arg1: i32) -> (i32, i32) {
    %c0_i32 = arith.constant 0 : i32
    %c0_i32_0 = arith.constant 0 : i32
    return %arg1, %c0_i32 : i32, i32
  }
  func.func @transform_2(%arg0: i32, %arg1: i32) -> (i32, i32) {
    %c0_i32 = arith.constant 0 : i32
    %c0_i32_0 = arith.constant 0 : i32
    %c0_i32_1 = arith.constant 0 : i32
    return %c0_i32, %c0_i32_0 : i32, i32
  }
  func.func @transform_3(%arg0: i32, %arg1: i32) -> (i32, i32) {
    %c0_i32 = arith.constant 0 : i32
    %c0_i32_0 = arith.constant 0 : i32
    return %arg0, %c0_i32 : i32, i32
  }
  func.func @transform_4(%arg0: i32, %arg1: i32) -> (i32, i32) {
    %c0_i32 = arith.constant 0 : i32
    %c0_i32_0 = arith.constant 0 : i32
    return %arg0, %c0_i32 : i32, i32
  }
}

</mosaic_0001>

<llo_original>
// kernel: tpu_custom_call.1
$region0: #{tpu_custom_call.1}
  #allocation0 [shape = 'u32[]', space=smem, size = 0x4, offset = 0x4, fixed_abs, tag = 'smem constant byte address 0x4 - core index']
  #allocation1 [shape = 'u32[144,128]{1,0:T(1,128)}', space=vmem, size = 0x12000, scoped, tag = 'internal scratch']
  #allocation2 [shape = 'f32[16,1]{1,0:T(8,128)}', space=vmem, size = 0x2000, scoped, tag = 'scratch operand']
  %s0 = inlined_call_operand.hbm [shape: bf16[32,1024], index: 0, kind: input, shape index: {}]
  %s1 = inlined_call_operand.hbm [shape: bf16[1024,128], index: 1, kind: input, shape index: {}]
  %s2 = inlined_call_operand.vmem [shape: f32[1,128], index: 2, kind: input, shape index: {}]
  %s3 = inlined_call_operand.hbm [shape: f32[32,128], index: 3, kind: output, shape index: {0}]
  %s4 = inlined_call_operand.vmem [shape: f32[32,1], index: 4, kind: output, shape index: {1}]
  %5 = xla_tuple %s3, %s4
  %s6 = sld [smem:[#allocation0]]
  $region69: #{tpu_custom_call.1} parent=0
    _
  %s8 = ssub.s32 1, %s6
  %s9 = scalar_select 0, %s8, %s6
  $region1: #{tpu_custom_call.1} parent=0
    #allocation3 [shape = 'u8[16384]{0}', space=vmem, size = 0x4000, scoped, tag = 'input window, operand 0']
    #allocation4 [shape = 's32[2]{0}', space=sflag, size = 0x8, scoped, tag = 'scoped memory for tpu_custom_call.1']
    #allocation5 [shape = 's32[2]{0}', space=sflag, size = 0x8, scoped, tag = 'scoped memory for tpu_custom_call.1']
    #allocation6 [shape = 'u8[131072]{0}', space=vmem, size = 0x20000, scoped, tag = 'input window, operand 1']
    #allocation7 [shape = 's32[2]{0}', space=sflag, size = 0x8, scoped, tag = 'scoped memory for tpu_custom_call.1']
    #allocation8 [shape = 'u8[16384]{0}', space=vmem, size = 0x4000, scoped, tag = 'output window, operand 0']
    %10 = vsyncpa [#allocation4], 0
    %s11 = scalar_lea.sflag [#allocation4], 1
    %12 = vsyncpa %s11, 0
    %13 = vsyncpa [#allocation7], 0
    %s14 = scalar_lea.sflag [#allocation7], 1
    %15 = vsyncpa %s14, 0
    %16 = vsyncpa [#allocation5], 0
    %s17 = scalar_lea.sflag [#allocation5], 1
    %18 = vsyncpa %s17, 0
    loop: start=0, step=1, limit=10
    $region2: #{tpu_custom_call.1} parent=1 // loop_pre_header
      _
    $region3: #{tpu_custom_call.1} parent=1 // loop_header
      %s20 = sphi 0, %s24
      %p21 = scmp.ge.s32.totalorder %s20, 10
      %s27 = sphi 0, %s39
      %s28 = sphi 0, %s35
      %s29 = sphi 0, %s27
      %s30 = sphi 0, %s28
      %s31 = sphi 0, %s29
      %s32 = sphi 0, %s30
      %s44 = sphi 0, %s46
      %s47 = sphi 0, %s44
      %s48 = sphi 0, %s47
      %s64 = sphi 0, %s48
      %s70 = sphi 0, %s72
      %s73 = sphi 0, %s70
      %s74 = sphi 0, %s73
      %s90 = sphi 0, %s74
      %s94 = sphi 0, %s94
      %s96 = sphi 0, %s94
      %s97 = sphi 0, %s96
      %s111 = sphi 0, %s97
      %s117 = sphi 0, %s119
      %s120 = sphi 0, %s117
      %s121 = sphi 0, %s120
      %s137 = sphi 0, %s121
      %s143 = sphi 0, %s145
      %s146 = sphi 0, %s143
      %s147 = sphi 0, %s146
      %s163 = sphi 0, %s147
    $region4: #{tpu_custom_call.1} parent=1 // loop_header_branch
      %23 = sbr.rel (%p21) target = $region8
    $region5: #{tpu_custom_call.1} parent=1 // loop_body
      %s25 = ssub.s32 %s20, 1
      %s26 = ssub.s32 %s20, 2
      %s33 = sadd.s32 1, %s28
      %p34 = scmp.ge.s32.totalorder %s33, 4
      %s35 = scalar_select %p34, 0, %s33
      %s36 = sadd.s32 1, %s27
      %s37 = scalar_select %p34, %s36, %s27
      %p38 = scmp.ge.s32.totalorder %s37, 2
      %s39 = scalar_select %p38, 0, %s37
      %s40 = ssub.s32 %s27, %s39
      %s41 = ssub.s32 %s28, %s35
      %s42 = sor.u32 %s40, %s41
      %p43 = scmp.eq.s32.totalorder %s42, 0
      %s45 = sadd.s32 %s44, 1
      %s46 = scalar_select %p43, %s44, %s45
      %p49 = pneg %p43
      %p50 = scmp.eq.s32.totalorder %s20, 7
      %p51 = por %p49, %p50
      %p52 = scmp.ne.s32.totalorder %s44, %s47
      %p53 = scmp.eq.s32.totalorder %s20, 0
      %p54 = por %p52, %p53
      %p55 = scmp.ne.s32.totalorder %s44, %s47
      %p56 = scmp.eq.s32.totalorder %s25, 7
      %p57 = por %p55, %p56
      %p58 = scmp.ne.s32.totalorder %s47, %s48
      %p59 = scmp.eq.s32.totalorder %s25, 0
      %p60 = por %p58, %p59
      %p61 = scmp.ne.s32.totalorder %s47, %s48
      %p62 = scmp.eq.s32.totalorder %s26, 7
      %p63 = por %p61, %p62
      %p65 = scmp.ne.s32.totalorder %s48, %s64
      %p66 = scmp.eq.s32.totalorder %s26, 0
      %p67 = por %p65, %p66
      %s68 = ssub.s32 %s28, %s35
      %p69 = scmp.eq.s32.totalorder %s68, 0
      %s71 = sadd.s32 %s70, 1
      %s72 = scalar_select %p69, %s70, %s71
      %p75 = pneg %p69
      %p76 = scmp.eq.s32.totalorder %s20, 7
      %p77 = por %p75, %p76
      %p78 = scmp.ne.s32.totalorder %s70, %s73
      %p79 = scmp.eq.s32.totalorder %s20, 0
      %p80 = por %p78, %p79
      %p81 = scmp.ne.s32.totalorder %s70, %s73
      %p82 = scmp.eq.s32.totalorder %s25, 7
      %p83 = por %p81, %p82
      %p84 = scmp.ne.s32.totalorder %s73, %s74
      %p85 = scmp.eq.s32.totalorder %s25, 0
      %p86 = por %p84, %p85
      %p87 = scmp.ne.s32.totalorder %s73, %s74
      %p88 = scmp.eq.s32.totalorder %s26, 7
      %p89 = por %p87, %p88
      %p91 = scmp.ne.s32.totalorder %s74, %s90
      %p92 = scmp.eq.s32.totalorder %s26, 0
      %p93 = por %p91, %p92
      %s95 = sadd.s32 %s94, 1
      %p98 = scmp.eq.s32.totalorder %s20, 7
      %p99 = scmp.ne.s32.totalorder %s94, %s96
      %p100 = scmp.eq.s32.totalorder %s20, 0
      %p101 = por %p99, %p100
      %p102 = scmp.ne.s32.totalorder %s94, %s96
      %p103 = scmp.eq.s32.totalorder %s25, 7
      %p104 = por %p102, %p103
      %p105 = scmp.ne.s32.totalorder %s96, %s97
      %p106 = scmp.eq.s32.totalorder %s25, 0
      %p107 = por %p105, %p106
      %p108 = scmp.ne.s32.totalorder %s96, %s97
      %p109 = scmp.eq.s32.totalorder %s26, 7
      %p110 = por %p108, %p109
      %p112 = scmp.ne.s32.totalorder %s97, %s111
      %p113 = scmp.eq.s32.totalorder %s26, 0
      %p114 = por %p112, %p113
      %s115 = ssub.s32 %s27, %s39
      %p116 = scmp.eq.s32.totalorder %s115, 0
      %s118 = sadd.s32 %s117, 1
      %s119 = scalar_select %p116, %s117, %s118
      %p122 = pneg %p116
      %p123 = scmp.eq.s32.totalorder %s20, 7
      %p124 = por %p122, %p123
      %p125 = scmp.ne.s32.totalorder %s117, %s120
      %p126 = scmp.eq.s32.totalorder %s20, 0
      %p127 = por %p125, %p126
      %p128 = scmp.ne.s32.totalorder %s117, %s120
      %p129 = scmp.eq.s32.totalorder %s25, 7
      %p130 = por %p128, %p129
      %p131 = scmp.ne.s32.totalorder %s120, %s121
      %p132 = scmp.eq.s32.totalorder %s25, 0
      %p133 = por %p131, %p132
      %p134 = scmp.ne.s32.totalorder %s120, %s121
      %p135 = scmp.eq.s32.totalorder %s26, 7
      %p136 = por %p134, %p135
      %p138 = scmp.ne.s32.totalorder %s121, %s137
      %p139 = scmp.eq.s32.totalorder %s26, 0
      %p140 = por %p138, %p139
      %s141 = ssub.s32 %s27, %s39
      %p142 = scmp.eq.s32.totalorder %s141, 0
      %s144 = sadd.s32 %s143, 1
      %s145 = scalar_select %p142, %s143, %s144
      %p148 = pneg %p142
      %p149 = scmp.eq.s32.totalorder %s20, 7
      %p150 = por %p148, %p149
      %p151 = scmp.ne.s32.totalorder %s143, %s146
      %p152 = scmp.eq.s32.totalorder %s20, 0
      %p153 = por %p151, %p152
      %p154 = scmp.ne.s32.totalorder %s143, %s146
      %p155 = scmp.eq.s32.totalorder %s25, 7
      %p156 = por %p154, %p155
      %p157 = scmp.ne.s32.totalorder %s146, %s147
      %p158 = scmp.eq.s32.totalorder %s25, 0
      %p159 = por %p157, %p158
      %p160 = scmp.ne.s32.totalorder %s146, %s147
      %p161 = scmp.eq.s32.totalorder %s26, 7
      %p162 = por %p160, %p161
      %p164 = scmp.ne.s32.totalorder %s147, %s163
      %p165 = scmp.eq.s32.totalorder %s26, 0
      %p166 = por %p164, %p165
      %p167 = scmp.le.s32.totalorder 1, %s20
      %p168 = scmp.lt.s32.totalorder %s20, 9
      %p169 = pnand %p167, %p168
      %p170 = pneg %p169
      // Predicated region
      $region9: #{tpu_custom_call.1} parent=5 // pred_check
        _
      $region10: #{tpu_custom_call.1} parent=5 // pred_check_branch
        %172 = sbr.rel (%p169) target = $region12
      $region11: #{tpu_custom_call.1} parent=5 // pred_region
        %s173 = ssub.s32 %s20, 1
        // Predicated region
        $region13: #{tpu_custom_call.1} parent=11 // pred_check
          %p174 = pneg %p107
        $region14: #{tpu_custom_call.1} parent=11 // pred_check_branch
          %176 = sbr.rel (%p174) target = $region16
        $region15: #{tpu_custom_call.1} parent=11 // pred_region
          _
        $region16: #{tpu_custom_call.1} parent=11 // pred_fallthru
          _
      $region12: #{tpu_custom_call.1} parent=5 // pred_fallthru
        _
      %p177 = scmp.lt.s32.totalorder %s20, 8
      // Predicated region
      $region17: #{tpu_custom_call.1} parent=5 // pred_check
        %p178 = pneg %p177
      $region18: #{tpu_custom_call.1} parent=5 // pred_check_branch
        %180 = sbr.rel (%p178) target = $region20
      $region19: #{tpu_custom_call.1} parent=5 // pred_region
        // Predicated region
        $region21: #{tpu_custom_call.1} parent=19 // pred_check
          %p181 = pneg %p54
        $region22: #{tpu_custom_call.1} parent=19 // pred_check_branch
          %183 = sbr.rel (%p181) target = $region24
        $region23: #{tpu_custom_call.1} parent=19 // pred_region
          %s184 = sand.u32 %s44, 1
          %s185 = scalar_lea.sflag [#allocation4], %s184
          %s186 = sand.u32 %s44, 1
          %s187 = smul.addr %s186, 16
          %s188 = scalar_lea.vmem [#allocation3], %s187
          %s189 = smul.u32 2, %s27
          %s190 = smul.u32 2, %s28
          %s192 = ssub.s32 256, 256
          %193 = vsyncadd %s185, %s192
          %s194 = smul.addr %s189, 8
          %s195 = sadd.s32 %s190, %s194
          %s196 = smul.addr %s195, 64
          %s197 = scalar_lea.hbm %s0, %s196
          %s198 = sshll.u32 %s188, 4
          %s199 = int_to_ptr.vmem [resolvable:$true] %s198
          %204 = dma.hbm_to_vmem [thread:$0]  %s197, 256, %s199, %s185, 512, 128, 8
        $region24: #{tpu_custom_call.1} parent=19 // pred_fallthru
          _
        // Predicated region
        $region25: #{tpu_custom_call.1} parent=19 // pred_check
          %p205 = pneg %p80
        $region26: #{tpu_custom_call.1} parent=19 // pred_check_branch
          %207 = sbr.rel (%p205) target = $region28
        $region27: #{tpu_custom_call.1} parent=19 // pred_region
          %s208 = sand.u32 %s70, 1
          %s209 = scalar_lea.sflag [#allocation7], %s208
          %s210 = sand.u32 %s70, 1
          %s211 = smul.addr %s210, 128
          %s212 = scalar_lea.vmem [#allocation6], %s211
          %s213 = smul.u32 32, %s28
          %s215 = ssub.s32 2048, 2048
          %216 = vsyncadd %s209, %s215
          %s217 = smul.addr %s213, 64
          %s218 = scalar_lea.hbm %s1, %s217
          %s219 = sshll.u32 %s212, 4
          %s220 = int_to_ptr.vmem [resolvable:$true] %s219
          %225 = dma.hbm_to_vmem [thread:$0]  %s218, 2048, %s220, %s209, 64, 64, 4
        $region28: #{tpu_custom_call.1} parent=19 // pred_fallthru
          _
      $region20: #{tpu_custom_call.1} parent=5 // pred_fallthru
        _
      %p226 = scmp.le.s32.totalorder 1, %s20
      %p227 = scmp.lt.s32.totalorder %s20, 9
      %p228 = pnand %p226, %p227
      %p229 = pneg %p228
      // Predicated region
      $region29: #{tpu_custom_call.1} parent=5 // pred_check
        _
      $region30: #{tpu_custom_call.1} parent=5 // pred_check_branch
        %231 = sbr.rel (%p228) target = $region32
      $region31: #{tpu_custom_call.1} parent=5 // pred_region
        %s232 = ssub.s32 %s20, 1
        %s233 = sand.u32 %s47, 1
        %s234 = scalar_lea.sflag [#allocation4], %s233
        %s235 = sand.u32 %s47, 1
        %s236 = smul.addr %s235, 16
        %s237 = scalar_lea.vmem [#allocation3], %s236
        // Predicated region
        $region33: #{tpu_custom_call.1} parent=31 // pred_check
          %p238 = pneg %p60
        $region34: #{tpu_custom_call.1} parent=31 // pred_check_branch
          %240 = sbr.rel (%p238) target = $region36
        $region35: #{tpu_custom_call.1} parent=31 // pred_region
          %241 = dma.done %s234, 256
        $region36: #{tpu_custom_call.1} parent=31 // pred_fallthru
          _
        %s242 = sand.u32 %s73, 1
        %s243 = scalar_lea.sflag [#allocation7], %s242
        %s244 = sand.u32 %s73, 1
        %s245 = smul.addr %s244, 128
        %s246 = scalar_lea.vmem [#allocation6], %s245
        // Predicated region
        $region37: #{tpu_custom_call.1} parent=31 // pred_check
          %p247 = pneg %p86
        $region38: #{tpu_custom_call.1} parent=31 // pred_check_branch
          %249 = sbr.rel (%p247) target = $region40
        $region39: #{tpu_custom_call.1} parent=31 // pred_region
          %250 = dma.done %s243, 2048
        $region40: #{tpu_custom_call.1} parent=31 // pred_fallthru
          _
        %s251 = sand.u32 %s47, 1
        %s252 = scalar_lea.sflag [#allocation4], %s251
        %s253 = sand.u32 %s47, 1
        %s254 = smul.addr %s253, 16
        %s255 = scalar_lea.vmem [#allocation3], %s254
        %p256 = pneg %p60
        %p257 = pneg %p57
        %s258 = sand.u32 %s73, 1
        %s259 = scalar_lea.sflag [#allocation7], %s258
        %s260 = sand.u32 %s73, 1
        %s261 = smul.addr %s260, 128
        %s262 = scalar_lea.vmem [#allocation6], %s261
        %p263 = pneg %p86
        %p264 = pneg %p83
        %p265 = pneg %p107
        %p266 = pneg %p104
        %p267 = pneg %p133
        %p268 = pneg %p130
        %s269 = sand.u32 %s120, 1
        %s270 = scalar_lea.sflag [#allocation5], %s269
        %s271 = sand.u32 %s120, 1
        %s272 = smul.addr %s271, 16
        %s273 = scalar_lea.vmem [#allocation8], %s272
        %p274 = pneg %p159
        %p275 = pneg %p156
        %s276 = smul.u32 2, %s29
        %p277 = scmp.lt.s32.totalorder %s276, 3
        %s278 = scalar_select %p277, %s276, 3
        %s279 = smul.addr %s278, 8
        %s280 = scalar_lea.vmem %s4, %s279
        %s281 = smul.u32 2, %s29
        %s282 = smul.u32 2, %s30
        %s283 = smul.u32 32, %s30
        %s284 = smul.u32 2, %s29
        %s285 = smul.u32 2, %s29
        %p286 = scmp.lt.s32.totalorder %s285, 3
        %s287 = scalar_select %p286, %s285, 3
        %s288 = smul.addr %s287, 8
        %s289 = scalar_lea.vmem %s4, %s288
        %s290 = smul.u32 2, %s29
        %p292 = scmp.eq.s32.totalorder %s30, 0
        // Predicated region
        $region41: #{tpu_custom_call.1} parent=31 // pred_check
          %p293 = pneg %p292
        $region42: #{tpu_custom_call.1} parent=31 // pred_check_branch
          %295 = sbr.rel (%p293) target = $region44
        $region43: #{tpu_custom_call.1} parent=31 // pred_region
          %296 = vst [vmem:[%s273] sm:$0xff] 0.0
          %297 = vst [vmem:[%s273 + $0x8] sm:$0xff] 0.0
          %vm298 = vcmask 7168
          %299 = vst.msk [vmem:[%s289] sm:$0xff] %vm298, 0.0
          %300 = vst.msk [vmem:[%s289 + $0x8] sm:$0xff] %vm298, 0.0
          %301 = vst.msk [vmem:[#allocation2] sm:$0xff] %vm298, 0.0
          %302 = vst.msk [vmem:[#allocation2 + $0x8] sm:$0xff] %vm298, 0.0
        $region44: #{tpu_custom_call.1} parent=31 // pred_fallthru
          _
        %v303 = vld [vmem:[%s237] sm:$0xff]
        %v304 = vld [vmem:[%s237 + $0x8] sm:$0xff]
        %v305 = vld [vmem:[%s273] sm:$0xff]
        %v306 = vld [vmem:[%s273 + $0x8] sm:$0xff]
        %v307 = vld [vmem:[%s246] sm:$0xf]
        %v308 = vld [vmem:[%s246 + $0x4] sm:$0xf]
        %v309 = vld [vmem:[%s246 + $0x8] sm:$0xf]
        %v310 = vld [vmem:[%s246 + $0xc] sm:$0xf]
        %v311 = vld [vmem:[%s246 + $0x10] sm:$0xf]
        %v312 = vld [vmem:[%s246 + $0x14] sm:$0xf]
        %v313 = vld [vmem:[%s246 + $0x18] sm:$0xf]
        %v314 = vld [vmem:[%s246 + $0x1c] sm:$0xf]
        %v315 = vld [vmem:[%s246 + $0x20] sm:$0xf]
        %v316 = vld [vmem:[%s246 + $0x24] sm:$0xf]
        %v317 = vld [vmem:[%s246 + $0x28] sm:$0xf]
        %v318 = vld [vmem:[%s246 + $0x2c] sm:$0xf]
        %v319 = vld [vmem:[%s246 + $0x30] sm:$0xf]
        %v320 = vld [vmem:[%s246 + $0x34] sm:$0xf]
        %v321 = vld [vmem:[%s246 + $0x38] sm:$0xf]
        %v322 = vld [vmem:[%s246 + $0x3c] sm:$0xf]
        %v323 = vld [vmem:[%s246 + $0x40] sm:$0xf]
        %v324 = vld [vmem:[%s246 + $0x44] sm:$0xf]
        %v325 = vld [vmem:[%s246 + $0x48] sm:$0xf]
        %v326 = vld [vmem:[%s246 + $0x4c] sm:$0xf]
        %v327 = vld [vmem:[%s246 + $0x50] sm:$0xf]
        %v328 = vld [vmem:[%s246 + $0x54] sm:$0xf]
        %v329 = vld [vmem:[%s246 + $0x58] sm:$0xf]
        %v330 = vld [vmem:[%s246 + $0x5c] sm:$0xf]
        %v331 = vld [vmem:[%s246 + $0x60] sm:$0xf]
        %v332 = vld [vmem:[%s246 + $0x64] sm:$0xf]
        %v333 = vld [vmem:[%s246 + $0x68] sm:$0xf]
        %v334 = vld [vmem:[%s246 + $0x6c] sm:$0xf]
        %v335 = vld [vmem:[%s246 + $0x70] sm:$0xf]
        %v336 = vld [vmem:[%s246 + $0x74] sm:$0xf]
        %v337 = vld [vmem:[%s246 + $0x78] sm:$0xf]
        %v338 = vld [vmem:[%s246 + $0x7c] sm:$0xf]
        %v341 = vunpack.c.l.b16 %v303
        %v342 = vunpack.c.h.b16 %v303
        %v343 = vunpack.c.l.b16 %v304
        %v344 = vunpack.c.h.b16 %v304
        %v345 = vpack.c.b16 %v343, %v341
        %v346 = vpack.c.b16 %v344, %v342
        %v381 = vunpack.c.l.b16 %v307
        %v382 = vunpack.c.l.b16 %v308
        %v383 = vunpack.c.l.b16 %v309
        %v384 = vunpack.c.l.b16 %v310
        %v385 = vunpack.c.l.b16 %v311
        %v386 = vunpack.c.l.b16 %v312
        %v387 = vunpack.c.l.b16 %v313
        %v388 = vunpack.c.l.b16 %v314
        %v389 = vunpack.c.l.b16 %v315
        %v390 = vunpack.c.l.b16 %v316
        %v391 = vunpack.c.l.b16 %v317
        %v392 = vunpack.c.l.b16 %v318
        %v393 = vunpack.c.l.b16 %v319
        %v394 = vunpack.c.l.b16 %v320
        %v395 = vunpack.c.l.b16 %v321
        %v396 = vunpack.c.l.b16 %v322
        %v397 = vunpack.c.l.b16 %v323
        %v398 = vunpack.c.l.b16 %v324
        %v399 = vunpack.c.l.b16 %v325
        %v400 = vunpack.c.l.b16 %v326
        %v401 = vunpack.c.l.b16 %v327
        %v402 = vunpack.c.l.b16 %v328
        %v403 = vunpack.c.l.b16 %v329
        %v404 = vunpack.c.l.b16 %v330
        %v405 = vunpack.c.l.b16 %v331
        %v406 = vunpack.c.l.b16 %v332
        %v407 = vunpack.c.l.b16 %v333
        %v408 = vunpack.c.l.b16 %v334
        %v409 = vunpack.c.l.b16 %v335
        %v410 = vunpack.c.l.b16 %v336
        %v411 = vunpack.c.l.b16 %v337
        %v412 = vunpack.c.l.b16 %v338
        %v413 = vpack.c.b16 %v382, %v381
        %v414 = vpack.c.b16 %v384, %v383
        %v415 = vpack.c.b16 %v386, %v385
        %v416 = vpack.c.b16 %v388, %v387
        %v417 = vpack.c.b16 %v390, %v389
        %v418 = vpack.c.b16 %v392, %v391
        %v419 = vpack.c.b16 %v394, %v393
        %v420 = vpack.c.b16 %v396, %v395
        %v421 = vpack.c.b16 %v398, %v397
        %v422 = vpack.c.b16 %v400, %v399
        %v423 = vpack.c.b16 %v402, %v401
        %v424 = vpack.c.b16 %v404, %v403
        %v425 = vpack.c.b16 %v406, %v405
        %v426 = vpack.c.b16 %v408, %v407
        %v427 = vpack.c.b16 %v410, %v409
        %v428 = vpack.c.b16 %v412, %v411
        %445 = vmatprep.subr.bf16.mxu0 0
        %446 = vmatpush1.bf16.msra.mxu0 %v420
        %447 = vmatprep.subr.bf16.mxu0 0
        %448 = vmatpush1.bf16.msra.mxu0 %v419
        %449 = vmatprep.subr.bf16.mxu0 0
        %450 = vmatpush1.bf16.msra.mxu0 %v418
        %451 = vmatprep.subr.bf16.mxu0 0
        %452 = vmatpush1.bf16.msra.mxu0 %v417
        %453 = vmatprep.subr.bf16.mxu0 0
        %454 = vmatpush1.bf16.msra.mxu0 %v416
        %455 = vmatprep.subr.bf16.mxu0 0
        %456 = vmatpush1.bf16.msra.mxu0 %v415
        %457 = vmatprep.subr.bf16.mxu0 0
        %458 = vmatpush1.bf16.msra.mxu0 %v414
        %459 = vmatprep.subr.bf16.mxu0 0
        %460 = vmatpush1.bf16.msra.mxu0 %v413
        %461 = vmatprep.subr.bf16.mxu0 0
        %462 = vmatpush2.bf16.msra.mxu0 %v428
        %463 = vmatprep.subr.bf16.mxu0 0
        %464 = vmatpush2.bf16.msra.mxu0 %v427
        %465 = vmatprep.subr.bf16.mxu0 0
        %466 = vmatpush2.bf16.msra.mxu0 %v426
        %467 = vmatprep.subr.bf16.mxu0 0
        %468 = vmatpush2.bf16.msra.mxu0 %v425
        %469 = vmatprep.subr.bf16.mxu0 0
        %470 = vmatpush2.bf16.msra.mxu0 %v424
        %471 = vmatprep.subr.bf16.mxu0 0
        %472 = vmatpush2.bf16.msra.mxu0 %v423
        %473 = vmatprep.subr.bf16.mxu0 0
        %474 = vmatpush2.bf16.msra.mxu0 %v422
        %475 = vmatprep.subr.bf16.mxu0 0
        %476 = vmatpush2.bf16.msra.mxu0 %v421
        %477 = vmatprep.mubr.bf16.mxu0 %v346
        %478 = vmatmul.mubr.bf16.gmra.mxu0 %v345
        %v479 = vpop.f32.mrf.mxu0
        %v480 = vadd.f32 0.0, %v479
        %v481 = vpop.f32.mrf.mxu0
        %v482 = vpop.f32.mrf.mxu0
        %v483 = vadd.f32 0.0, %v482
        %v484 = vpop.f32.mrf.mxu0
        %485 = vdwg.mxu0
        %v486 = vadd.f32 %v305, %v480
        %v487 = vadd.f32 %v306, %v483
        %488 = vst [vmem:[%s273] sm:$0xff] %v486
        %489 = vst [vmem:[%s273 + $0x8] sm:$0xff] %v487
        %v490 = vunpack.c.l.bf16 %v303
        %v491 = vunpack.c.h.bf16 %v303
        %v492 = vunpack.c.l.bf16 %v304
        %v493 = vunpack.c.h.bf16 %v304
        %v494 = vld [vmem:[#allocation2] sm:$0xff]
        %v495 = vld [vmem:[#allocation2 + $0x8] sm:$0xff]
        %v496 = vmul.f32 %v490, %v490
        %v497 = vmul.f32 %v491, %v491
        %v498 = vmul.f32 %v492, %v492
        %v499 = vmul.f32 %v493, %v493
        %v500 = vadd.f32 %v496, %v497
        %501 = vadd.xlane.f32.xlu0 %v500
        %v502 = vpop.xlane.xlu0 %501
        %v503 = vadd.f32 %v498, %v499
        %504 = vadd.xlane.f32.xlu0 %v503
        %v505 = vpop.xlane.xlu0 %504
        %v506 = vadd.f32 %v494, %v502
        %v507 = vadd.f32 %v495, %v505
        %vm508 = vcmask 7168
        %509 = vst.msk [vmem:[#allocation2] sm:$0xff] %vm508, %v506
        %510 = vst.msk [vmem:[#allocation2 + $0x8] sm:$0xff] %vm508, %v507
        %v511 = vld [vmem:[%s289] sm:$0xff]
        %v512 = vld [vmem:[%s289 + $0x8] sm:$0xff]
        %v513 = vadd.f32 %v490, %v491
        %514 = vadd.xlane.f32.xlu0 %v513
        %v515 = vpop.xlane.xlu0 %514
        %v516 = vadd.f32 %v492, %v493
        %517 = vadd.xlane.f32.xlu0 %v516
        %v518 = vpop.xlane.xlu0 %517
        %v519 = vadd.f32 %v511, %v515
        %v520 = vadd.f32 %v512, %v518
        %521 = vst.msk [vmem:[%s289] sm:$0xff] %vm508, %v519
        %522 = vst.msk [vmem:[%s289 + $0x8] sm:$0xff] %vm508, %v520
        %p523 = scmp.eq.s32.totalorder %s30, 3
        // Predicated region
        $region45: #{tpu_custom_call.1} parent=31 // pred_check
          %p524 = pneg %p523
        $region46: #{tpu_custom_call.1} parent=31 // pred_check_branch
          %526 = sbr.rel (%p524) target = $region48
        $region47: #{tpu_custom_call.1} parent=31 // pred_region
          %v527 = vld [vmem:[%s273] sm:$0xff]
          %v528 = vld [vmem:[%s273 + $0x8] sm:$0xff]
          %v529 = vld [vmem:[#allocation2] sm:$0xff]
          %v530 = vld [vmem:[#allocation2 + $0x8] sm:$0xff]
          %v531 = vrsqrt.pop %v529
          %v532 = vrsqrt.pop %v530
          %534 = vset.pattern.permute.xlu0 0
          %535 = vperm.xlu0 %534, %v531
          %v536 = vpop.permute.xlu0 %535
          %539 = vset.pattern.permute.xlu0 0
          %540 = vperm.xlu0 %539, %v532
          %v541 = vpop.permute.xlu0 %540
          %v543 = vmul.f32 %v527, %v536
          %v544 = vmul.f32 %v528, %v541
          %v545 = vld [vmem:[%s2] sm:$0x1]
          %v547 = vlaneseq
          %v548 = vshrl.u32 %v547, 7
          %v549 = vsub.s32 0, %v548
          %v550 = vrot.slane %v545, %v549
          %v552 = vadd.f32 %v543, %v550
          %v553 = vadd.f32 %v544, %v550
          %554 = vst [vmem:[%s273] sm:$0xff] %v552
          %555 = vst [vmem:[%s273 + $0x8] sm:$0xff] %v553
        $region48: #{tpu_custom_call.1} parent=31 // pred_fallthru
          _
        %s556 = sand.u32 %s120, 1
        %s557 = scalar_lea.sflag [#allocation5], %s556
        %s558 = sand.u32 %s120, 1
        %s559 = smul.addr %s558, 16
        %s560 = scalar_lea.vmem [#allocation8], %s559
        %s561 = smul.u32 2, %s29
        %p562 = scmp.lt.s32.totalorder %s561, 3
        %s563 = scalar_select %p562, %s561, 3
        %s564 = smul.addr %s563, 8
        %s565 = scalar_lea.vmem %s4, %s564
        // Predicated region
        $region49: #{tpu_custom_call.1} parent=31 // pred_check
          %p566 = pneg %p130
        $region50: #{tpu_custom_call.1} parent=31 // pred_check_branch
          %568 = sbr.rel (%p566) target = $region52
        $region51: #{tpu_custom_call.1} parent=31 // pred_region
          %s569 = smul.u32 2, %s29
          %s571 = ssub.s32 256, 256
          %572 = vsyncadd %s557, %s571
          %s573 = smul.addr %s569, 128
          %s574 = scalar_lea.hbm %s3, %s573
          %s575 = sshll.u32 %s560, 4
          %s576 = int_to_ptr.vmem [resolvable:$true] %s575
          %581 = dma.vmem_to_hbm [thread:$0]  %s576, 256, %s574, %s557, 128, 128, 8
        $region52: #{tpu_custom_call.1} parent=31 // pred_fallthru
          _
        // Predicated region
        $region53: #{tpu_custom_call.1} parent=31 // pred_check
          %p582 = pneg %p156
        $region54: #{tpu_custom_call.1} parent=31 // pred_check_branch
          %584 = sbr.rel (%p582) target = $region56
        $region55: #{tpu_custom_call.1} parent=31 // pred_region
          %s585 = smul.u32 2, %s29
        $region56: #{tpu_custom_call.1} parent=31 // pred_fallthru
          _
      $region32: #{tpu_custom_call.1} parent=5 // pred_fallthru
        _
      %p586 = scmp.le.s32.totalorder 2, %s20
      // Predicated region
      $region57: #{tpu_custom_call.1} parent=5 // pred_check
        %p587 = pneg %p586
      $region58: #{tpu_custom_call.1} parent=5 // pred_check_branch
        %589 = sbr.rel (%p587) target = $region60
      $region59: #{tpu_custom_call.1} parent=5 // pred_region
        %s590 = ssub.s32 %s20, 2
        // Predicated region
        $region61: #{tpu_custom_call.1} parent=59 // pred_check
          %p591 = pneg %p136
        $region62: #{tpu_custom_call.1} parent=59 // pred_check_branch
          %593 = sbr.rel (%p591) target = $region64
        $region63: #{tpu_custom_call.1} parent=59 // pred_region
          %s594 = sand.u32 %s121, 1
          %s595 = scalar_lea.sflag [#allocation5], %s594
          %s596 = sand.u32 %s121, 1
          %s597 = smul.addr %s596, 16
          %s598 = scalar_lea.vmem [#allocation8], %s597
          %599 = dma.done %s595, 256
        $region64: #{tpu_custom_call.1} parent=59 // pred_fallthru
          _
        // Predicated region
        $region65: #{tpu_custom_call.1} parent=59 // pred_check
          %p600 = pneg %p162
        $region66: #{tpu_custom_call.1} parent=59 // pred_check_branch
          %602 = sbr.rel (%p600) target = $region68
        $region67: #{tpu_custom_call.1} parent=59 // pred_region
          %s603 = smul.u32 2, %s31
          %p604 = scmp.lt.s32.totalorder %s603, 3
          %s605 = scalar_select %p604, %s603, 3
          %s606 = smul.addr %s605, 8
          %s607 = scalar_lea.vmem %s4, %s606
        $region68: #{tpu_custom_call.1} parent=59 // pred_fallthru
          _
      $region60: #{tpu_custom_call.1} parent=5 // pred_fallthru
        _
    $region6: #{tpu_custom_call.1} parent=1 // loop_footer
      %s24 = sadd.s32 1, %s20
    $region7: #{tpu_custom_call.1} parent=1 // loop_footer_branch
      %19 = sbr.rel target = $region3
    $region8: #{tpu_custom_call.1} parent=1 // loop_exit
      _
    %608 = vsyncpa [#allocation4], 1
    %s609 = scalar_lea.sflag [#allocation4], 1
    %610 = vsyncpa %s609, 1
    %611 = vsyncpa [#allocation7], 1
    %s612 = scalar_lea.sflag [#allocation7], 1
    %613 = vsyncpa %s612, 1
    %614 = vsyncpa [#allocation5], 1
    %s615 = scalar_lea.sflag [#allocation5], 1
    %616 = vsyncpa %s615, 1

</llo_original>
